<compile_context>
chip_gen: v6e
topology: v6e:2x2x1
jax: 0.10.0
libtpu: 0.0.40
codegen_flags: <defaults>
</compile_context>

<pallas_src>
import functools

import jax
import jax.numpy as jnp
from jax.experimental import pallas as pl
from jax.experimental.pallas import tpu as pltpu


# ----------------------------------------------------------------------------- kernels

def _acti_kernel_vpu(alpha_ref, gamma_ref, beta_ref, x_ref, o_ref, *, C):
    """VPU path for small channel counts.

    alpha_ref: SMEM (3,)    f32
    gamma_ref: SMEM (C*C,)  f32   (row-major gamma[i, j])
    beta_ref:  SMEM (C,)    f32
    x_ref:     VMEM (Nb, C, S_tile, 128) input tile (spatial on sublanes+lanes)
    o_ref:     VMEM (Nb, C, S_tile, 128)
    """
    a0 = alpha_ref[0]
    a1 = alpha_ref[1]
    a2 = alpha_ref[2]

    # Dense (Nb, 1, S_tile, 128) per-channel slabs: full sublane occupancy.
    xs = [x_ref[:, pl.ds(i, 1), :, :].astype(jnp.float32) for i in range(C)]
    x2s = [xi * xi for xi in xs]

    for i in range(C):
        # norm_i = beta[i] + sum_j gamma[i, j] * x_j^2    (C scalar*vector FMAs)
        acc = gamma_ref[i * C] * x2s[0]
        for j in range(1, C):
            acc = acc + gamma_ref[i * C + j] * x2s[j]
        norm_i = acc + beta_ref[i]
        # out_i = x_i * (a0*[x_i>0] + a1*sqrt(norm_i) + a2)
        # NOTE: sqrt assumes beta + gamma@x^2 >= 0 (standard non-negative GDN
        # reparameterization); the PyTorch reference applies no clamp either.
        scale_i = jnp.where(xs[i] > 0.0, a0, 0.0) + a1 * jnp.sqrt(norm_i) + a2
        # Dense (S_tile, 128) slab store per channel (unmasked when S_tile % 8 == 0).
        o_ref[:, pl.ds(i, 1), :, :] = (xs[i] * scale_i).astype(o_ref.dtype)


def _acti_kernel_mxu(alpha_ref, x_ref, gamma_ref, beta_ref, o_ref):
    """MXU path for larger channel counts.

    alpha_ref: SMEM (3,)   f32
    x_ref:     VMEM (C, T) spatial on lanes (C >= 16, lane-dense, sublane-dense)
    gamma_ref: VMEM (C, C) f32
    beta_ref:  VMEM (C, 1) f32
    o_ref:     VMEM (C, T)
    """
    x = x_ref[...].astype(jnp.float32)
    x2 = x * x
    norm = jnp.dot(gamma_ref[...], x2, preferred_element_type=jnp.float32)
    norm = norm + beta_ref[...]
    a0 = alpha_ref[0]
    a1 = alpha_ref[1]
    a2 = alpha_ref[2]
    scale = jnp.where(x > 0.0, a0, 0.0) + a1 * jnp.sqrt(norm) + a2
    o_ref[...] = (x * scale).astype(o_ref.dtype)


# ----------------------------------------------------------------------------- tiling

def _cdiv(a, b):
    return -(-a // b)


def _choose_tiling(N, C, S, itemsize, *, max_block_bytes,
                   target_step_bytes=512 * 1024, min_total_steps=8):
    """Pick (Nb, S_tile) for blocks of shape (Nb, C, S_tile, 128).

    S_tile is a multiple of 8 (dense (8,128) sublane tiles) or the full S
    extent; Nb > 1 is only used to batch tiny feature maps into worthwhile
    per-step DMA sizes.  A min-step heuristic keeps enough grid steps for
    megacore sharding (v7x: 2 TensorCores) and DMA pipelining.
    """
    per_row_bytes = C * 128 * itemsize
    max_rows = max(1, max_block_bytes // per_row_bytes)
    if S <= max_rows:
        s_tile = S                                  # full extent (any S allowed)
    else:
        s_tile = max(8, (max_rows // 8) * 8)        # multiple of 8

    item_bytes = s_tile * per_row_bytes
    nb = 1
    if s_tile == S and item_bytes < target_step_bytes:
        nb = min(N, max(1, min(target_step_bytes // item_bytes,
                               max_block_bytes // item_bytes)))

    def steps(nb_, st_):
        return _cdiv(N, nb_) * _cdiv(S, st_)

    while steps(nb, s_tile) < min_total_steps and nb > 1:
        nb = max(1, nb // 2)
    while (steps(nb, s_tile) < min_total_steps and s_tile > 8
           and s_tile % 16 == 0):
        s_tile //= 2

    return nb, s_tile


# ----------------------------------------------------------------------------- wrapper

def acti_block(x_nchw, alpha, gamma, beta, *, mxu_min_channels=16,
               max_block_bytes=3 * 1024 * 1024):
    """ActiBlock forward.

    x_nchw: (N, C, H, W) float32 or bfloat16
    alpha:  (3,)  architecture weights
    gamma:  (C, C) GDN gamma
    beta:   (C,)  GDN beta
    """
    N, C, H, W = x_nchw.shape
    HW = H * W
    S = _cdiv(HW, 128)
    HW_pad = S * 128
    itemsize = jnp.dtype(x_nchw.dtype).itemsize

    alpha = alpha.astype(jnp.float32)
    gamma = gamma.astype(jnp.float32)
    beta = beta.astype(jnp.float32)

    x_flat = x_nchw.reshape(N, C, HW)                       # free reshape
    if HW_pad != HW:
        # One-off pad so the spatial axis splits into dense 128-lane rows.
        x_flat = jnp.pad(x_flat, ((0, 0), (0, 0), (0, HW_pad - HW)))

    nb, s_tile = _choose_tiling(N, C, S, itemsize, max_block_bytes=max_block_bytes)
    smem_spec = pl.BlockSpec(memory_space=pltpu.MemorySpace.SMEM)

    if C < mxu_min_channels:
        # ---- small-C VPU path: (Nb, C, S_tile, 128) blocks, gamma/beta in SMEM ----
        x4 = x_flat.reshape(N, C, S, 128)
        grid = (_cdiv(N, nb), _cdiv(S, s_tile))
        block = (nb, C, s_tile, 128)
        idx = lambda b, s: (b, 0, s, 0)
        block_bytes = nb * C * s_tile * 128 * itemsize
        vmem_limit = int(min(40 << 20, max(32 << 20, 8 * block_bytes + (8 << 20))))

        out = pl.pallas_call(
            functools.partial(_acti_kernel_vpu, C=C),
            out_shape=jax.ShapeDtypeStruct((N, C, S, 128), x_nchw.dtype),
            grid_spec=pltpu.PrefetchScalarGridSpec(
                num_scalar_prefetch=0,
                grid=grid,
                in_specs=[smem_spec,                         # alpha (3,)
                          smem_spec,                         # gamma flat (C*C,)
                          smem_spec,                         # beta (C,)
                          pl.BlockSpec(block, idx)],         # x tile
                out_specs=pl.BlockSpec(block, idx),
            ),
            compiler_params=pltpu.CompilerParams(
                dimension_semantics=("parallel", "parallel"),
                vmem_limit_bytes=vmem_limit),
        )(alpha, gamma.reshape(C * C), beta, x4)
        out_flat = out.reshape(N, C, HW_pad)
    else:
        # ---- larger-C MXU path: (C, T) lane-major blocks, norm = gamma @ x^2 ----
        T = s_tile * 128
        grid = (N, _cdiv(HW_pad, T))
        x_spec = pl.BlockSpec((pl.Squeezed(), C, T), lambda n, s: (n, 0, s))
        block_bytes = C * T * itemsize
        vmem_limit = int(min(40 << 20, max(32 << 20, 8 * block_bytes + (8 << 20))))

        out_flat = pl.pallas_call(
            _acti_kernel_mxu,
            out_shape=jax.ShapeDtypeStruct((N, C, HW_pad), x_nchw.dtype),
            grid_spec=pltpu.PrefetchScalarGridSpec(
                num_scalar_prefetch=0,
                grid=grid,
                in_specs=[smem_spec,                                   # alpha
                          x_spec,                                      # x tile
                          pl.BlockSpec((C, C), lambda n, s: (0, 0)),   # gamma
                          pl.BlockSpec((C, 1), lambda n, s: (0, 0))],  # beta col
                out_specs=pl.BlockSpec((pl.Squeezed(), C, T),
                                       lambda n, s: (n, 0, s)),
            ),
            compiler_params=pltpu.CompilerParams(
                dimension_semantics=("parallel", "parallel"),
                vmem_limit_bytes=vmem_limit),
        )(alpha, x_flat, gamma, beta.reshape(C, 1))

    if HW_pad != HW:
        out_flat = out_flat[:, :, :HW]
    return out_flat.reshape(N, C, H, W)                     # free reshape back


# ----------------------------------------------------------------------------- reference

def acti_block_reference(x_nchw, alpha, gamma, beta):
    """Pure-JAX reference mirroring the PyTorch module."""
    x = x_nchw.astype(jnp.float32)
    relu = jnp.maximum(x, 0.0)
    norm = jnp.einsum("ij,njhw->nihw", gamma.astype(jnp.float32), x * x,
                      precision=jax.lax.Precision.HIGHEST)
    norm = norm + beta.astype(jnp.float32)[None, :, None, None]
    igdn = x * jnp.sqrt(norm)
    a = alpha.astype(jnp.float32)
    return a[0] * relu + a[1] * igdn + a[2] * x


if __name__ == "__main__":
    key = jax.random.PRNGKey(0)

    def run_case(idx, N, C, H, W, dtype=jnp.float32, atol=1e-5, rtol=1e-5):
        kx, ka, kg = jax.random.split(jax.random.fold_in(key, idx), 3)
        x = jax.random.normal(kx, (N, C, H, W), dtype=jnp.float32).astype(dtype)
        alpha = jax.random.uniform(ka, (3,), dtype=jnp.float32)
        beta = jnp.ones((C,), dtype=jnp.float32)
        # Non-negative gamma (standard GDN reparameterization) => norm >= 0.
        gamma = (0.1 * jnp.eye(C, dtype=jnp.float32)
                 + 0.01 * jax.random.uniform(kg, (C, C), dtype=jnp.float32))

        out = jax.block_until_ready(acti_block(x, alpha, gamma, beta))
        assert out.shape == (N, C, H, W)
        assert out.dtype == x.dtype
        ref = acti_block_reference(x, alpha, gamma, beta)
        assert jnp.allclose(out.astype(jnp.float32), ref, atol=atol, rtol=rtol), \
            ("mismatch vs reference", idx, N, C, H, W, str(dtype))

    # Main config implied by the module (in_channels == out_channels == 4): VPU path.
    run_case(0, 2, 4, 16, 16)
    # MXU path (C >= 16): channel mix as gamma @ x^2 on the MXU (loose tol: MXU f32 dot).
    run_case(1, 1, 32, 16, 16, atol=1e-2, rtol=1e-2)
    # Ragged spatial size (H*W not a multiple of 128): pad-and-slice path.
    run_case(2, 2, 4, 10, 10)
    # bf16 I/O (compute stays f32 in-kernel).
    run_case(3, 2, 4, 16, 16, dtype=jnp.bfloat16, atol=2e-2, rtol=2e-2)

    print("KERNEL_OK")
</pallas_src>

<mosaic_0001>
module attributes {stable_mosaic.version = 11 : i64} {
  func.func @_acti_kernel_vpu(%arg0: i32, %arg1: i32, %arg2: memref<3xf32, #tpu.memory_space<smem>>, %arg3: memref<16xf32, #tpu.memory_space<smem>>, %arg4: memref<4xf32, #tpu.memory_space<smem>>, %arg5: memref<1x4x2x128xf32, #tpu.memory_space<vmem>>, %arg6: memref<1x4x2x128xf32, #tpu.memory_space<vmem>>) attributes {dimension_semantics = [#tpu.dimension_semantics<parallel>, #tpu.dimension_semantics<parallel>], iteration_bounds = array<i64: 2, 1>, scalar_prefetch = 0 : i64, scratch_operands = 0 : i64, tpu.core_type = #tpu.core_type<tc>, window_params = [{transform_indices = @transform_0, window_bounds = array<i64: 3>}, {transform_indices = @transform_1, window_bounds = array<i64: 16>}, {transform_indices = @transform_2, window_bounds = array<i64: 4>}, {transform_indices = @transform_3, window_bounds = array<i64: 1, 4, 2, 128>}, {transform_indices = @transform_4, window_bounds = array<i64: 1, 4, 2, 128>}]} {
    %c0 = arith.constant 0 : index
    %0 = memref.load %arg2[%c0] : memref<3xf32, #tpu.memory_space<smem>>
    %c1 = arith.constant 1 : index
    %1 = memref.load %arg2[%c1] : memref<3xf32, #tpu.memory_space<smem>>
    %c2 = arith.constant 2 : index
    %2 = memref.load %arg2[%c2] : memref<3xf32, #tpu.memory_space<smem>>
    %c0_0 = arith.constant 0 : index
    %c0_1 = arith.constant 0 : index
    %c0_2 = arith.constant 0 : index
    %c0_3 = arith.constant 0 : index
    %3 = vector.load %arg5[%c0_0, %c0_1, %c0_2, %c0_3] : memref<1x4x2x128xf32, #tpu.memory_space<vmem>>, vector<1x1x2x128xf32>
    %c0_4 = arith.constant 0 : index
    %c1_5 = arith.constant 1 : index
    %c0_6 = arith.constant 0 : index
    %c0_7 = arith.constant 0 : index
    %4 = vector.load %arg5[%c0_4, %c1_5, %c0_6, %c0_7] : memref<1x4x2x128xf32, #tpu.memory_space<vmem>>, vector<1x1x2x128xf32>
    %c0_8 = arith.constant 0 : index
    %c2_9 = arith.constant 2 : index
    %c0_10 = arith.constant 0 : index
    %c0_11 = arith.constant 0 : index
    %5 = vector.load %arg5[%c0_8, %c2_9, %c0_10, %c0_11] : memref<1x4x2x128xf32, #tpu.memory_space<vmem>>, vector<1x1x2x128xf32>
    %c0_12 = arith.constant 0 : index
    %c3 = arith.constant 3 : index
    %c0_13 = arith.constant 0 : index
    %c0_14 = arith.constant 0 : index
    %6 = vector.load %arg5[%c0_12, %c3, %c0_13, %c0_14] : memref<1x4x2x128xf32, #tpu.memory_space<vmem>>, vector<1x1x2x128xf32>
    %7 = arith.mulf %3, %3 : vector<1x1x2x128xf32>
    %8 = arith.mulf %4, %4 : vector<1x1x2x128xf32>
    %9 = arith.mulf %5, %5 : vector<1x1x2x128xf32>
    %10 = arith.mulf %6, %6 : vector<1x1x2x128xf32>
    %c0_15 = arith.constant 0 : index
    %11 = memref.load %arg3[%c0_15] : memref<16xf32, #tpu.memory_space<smem>>
    %12 = vector.broadcast %11 : f32 to vector<1x1x2x128xf32>
    %13 = arith.mulf %12, %7 : vector<1x1x2x128xf32>
    %c1_16 = arith.constant 1 : index
    %14 = memref.load %arg3[%c1_16] : memref<16xf32, #tpu.memory_space<smem>>
    %15 = vector.broadcast %14 : f32 to vector<1x1x2x128xf32>
    %16 = arith.mulf %15, %8 : vector<1x1x2x128xf32>
    %17 = arith.addf %13, %16 : vector<1x1x2x128xf32>
    %c2_17 = arith.constant 2 : index
    %18 = memref.load %arg3[%c2_17] : memref<16xf32, #tpu.memory_space<smem>>
    %19 = vector.broadcast %18 : f32 to vector<1x1x2x128xf32>
    %20 = arith.mulf %19, %9 : vector<1x1x2x128xf32>
    %21 = arith.addf %17, %20 : vector<1x1x2x128xf32>
    %c3_18 = arith.constant 3 : index
    %22 = memref.load %arg3[%c3_18] : memref<16xf32, #tpu.memory_space<smem>>
    %23 = vector.broadcast %22 : f32 to vector<1x1x2x128xf32>
    %24 = arith.mulf %23, %10 : vector<1x1x2x128xf32>
    %25 = arith.addf %21, %24 : vector<1x1x2x128xf32>
    %c0_19 = arith.constant 0 : index
    %26 = memref.load %arg4[%c0_19] : memref<4xf32, #tpu.memory_space<smem>>
    %27 = vector.broadcast %26 : f32 to vector<1x1x2x128xf32>
    %28 = arith.addf %25, %27 : vector<1x1x2x128xf32>
    %cst = arith.constant 0.000000e+00 : f32
    %29 = vector.broadcast %cst : f32 to vector<1x1x2x128xf32>
    %30 = arith.cmpf ogt, %3, %29 : vector<1x1x2x128xf32>
    %cst_20 = arith.constant 0.000000e+00 : f32
    %31 = vector.broadcast %0 : f32 to vector<1x1x2x128xf32>
    %32 = vector.broadcast %cst_20 : f32 to vector<1x1x2x128xf32>
    %33 = arith.select %30, %31, %32 : vector<1x1x2x128xi1>, vector<1x1x2x128xf32>
    %34 = math.sqrt %28 : vector<1x1x2x128xf32>
    %35 = vector.broadcast %1 : f32 to vector<1x1x2x128xf32>
    %36 = arith.mulf %35, %34 : vector<1x1x2x128xf32>
    %37 = arith.addf %33, %36 : vector<1x1x2x128xf32>
    %38 = vector.broadcast %2 : f32 to vector<1x1x2x128xf32>
    %39 = arith.addf %37, %38 : vector<1x1x2x128xf32>
    %40 = arith.mulf %3, %39 : vector<1x1x2x128xf32>
    %c0_21 = arith.constant 0 : index
    %c0_22 = arith.constant 0 : index
    %c0_23 = arith.constant 0 : index
    %c0_24 = arith.constant 0 : index
    %41 = vector.load %arg6[%c0_21, %c0_22, %c0_23, %c0_24] : memref<1x4x2x128xf32, #tpu.memory_space<vmem>>, vector<1x1x2x128xf32>
    tpu.vector_store %arg6[%c0_21, %c0_22, %c0_23, %c0_24], %40 {strides = array<i32>} : memref<1x4x2x128xf32, #tpu.memory_space<vmem>>, vector<1x1x2x128xf32>,
    %c4 = arith.constant 4 : index
    %42 = memref.load %arg3[%c4] : memref<16xf32, #tpu.memory_space<smem>>
    %43 = vector.broadcast %42 : f32 to vector<1x1x2x128xf32>
    %44 = arith.mulf %43, %7 : vector<1x1x2x128xf32>
    %c5 = arith.constant 5 : index
    %45 = memref.load %arg3[%c5] : memref<16xf32, #tpu.memory_space<smem>>
    %46 = vector.broadcast %45 : f32 to vector<1x1x2x128xf32>
    %47 = arith.mulf %46, %8 : vector<1x1x2x128xf32>
    %48 = arith.addf %44, %47 : vector<1x1x2x128xf32>
    %c6 = arith.constant 6 : index
    %49 = memref.load %arg3[%c6] : memref<16xf32, #tpu.memory_space<smem>>
    %50 = vector.broadcast %49 : f32 to vector<1x1x2x128xf32>
    %51 = arith.mulf %50, %9 : vector<1x1x2x128xf32>
    %52 = arith.addf %48, %51 : vector<1x1x2x128xf32>
    %c7 = arith.constant 7 : index
    %53 = memref.load %arg3[%c7] : memref<16xf32, #tpu.memory_space<smem>>
    %54 = vector.broadcast %53 : f32 to vector<1x1x2x128xf32>
    %55 = arith.mulf %54, %10 : vector<1x1x2x128xf32>
    %56 = arith.addf %52, %55 : vector<1x1x2x128xf32>
    %c1_25 = arith.constant 1 : index
    %57 = memref.load %arg4[%c1_25] : memref<4xf32, #tpu.memory_space<smem>>
    %58 = vector.broadcast %57 : f32 to vector<1x1x2x128xf32>
    %59 = arith.addf %56, %58 : vector<1x1x2x128xf32>
    %cst_26 = arith.constant 0.000000e+00 : f32
    %60 = vector.broadcast %cst_26 : f32 to vector<1x1x2x128xf32>
    %61 = arith.cmpf ogt, %4, %60 : vector<1x1x2x128xf32>
    %cst_27 = arith.constant 0.000000e+00 : f32
    %62 = vector.broadcast %0 : f32 to vector<1x1x2x128xf32>
    %63 = vector.broadcast %cst_27 : f32 to vector<1x1x2x128xf32>
    %64 = arith.select %61, %62, %63 : vector<1x1x2x128xi1>, vector<1x1x2x128xf32>
    %65 = math.sqrt %59 : vector<1x1x2x128xf32>
    %66 = vector.broadcast %1 : f32 to vector<1x1x2x128xf32>
    %67 = arith.mulf %66, %65 : vector<1x1x2x128xf32>
    %68 = arith.addf %64, %67 : vector<1x1x2x128xf32>
    %69 = vector.broadcast %2 : f32 to vector<1x1x2x128xf32>
    %70 = arith.addf %68, %69 : vector<1x1x2x128xf32>
    %71 = arith.mulf %4, %70 : vector<1x1x2x128xf32>
    %c0_28 = arith.constant 0 : index
    %c1_29 = arith.constant 1 : index
    %c0_30 = arith.constant 0 : index
    %c0_31 = arith.constant 0 : index
    %72 = vector.load %arg6[%c0_28, %c1_29, %c0_30, %c0_31] : memref<1x4x2x128xf32, #tpu.memory_space<vmem>>, vector<1x1x2x128xf32>
    tpu.vector_store %arg6[%c0_28, %c1_29, %c0_30, %c0_31], %71 {strides = array<i32>} : memref<1x4x2x128xf32, #tpu.memory_space<vmem>>, vector<1x1x2x128xf32>,
    %c8 = arith.constant 8 : index
    %73 = memref.load %arg3[%c8] : memref<16xf32, #tpu.memory_space<smem>>
    %74 = vector.broadcast %73 : f32 to vector<1x1x2x128xf32>
    %75 = arith.mulf %74, %7 : vector<1x1x2x128xf32>
    %c9 = arith.constant 9 : index
    %76 = memref.load %arg3[%c9] : memref<16xf32, #tpu.memory_space<smem>>
    %77 = vector.broadcast %76 : f32 to vector<1x1x2x128xf32>
    %78 = arith.mulf %77, %8 : vector<1x1x2x128xf32>
    %79 = arith.addf %75, %78 : vector<1x1x2x128xf32>
    %c10 = arith.constant 10 : index
    %80 = memref.load %arg3[%c10] : memref<16xf32, #tpu.memory_space<smem>>
    %81 = vector.broadcast %80 : f32 to vector<1x1x2x128xf32>
    %82 = arith.mulf %81, %9 : vector<1x1x2x128xf32>
    %83 = arith.addf %79, %82 : vector<1x1x2x128xf32>
    %c11 = arith.constant 11 : index
    %84 = memref.load %arg3[%c11] : memref<16xf32, #tpu.memory_space<smem>>
    %85 = vector.broadcast %84 : f32 to vector<1x1x2x128xf32>
    %86 = arith.mulf %85, %10 : vector<1x1x2x128xf32>
    %87 = arith.addf %83, %86 : vector<1x1x2x128xf32>
    %c2_32 = arith.constant 2 : index
    %88 = memref.load %arg4[%c2_32] : memref<4xf32, #tpu.memory_space<smem>>
    %89 = vector.broadcast %88 : f32 to vector<1x1x2x128xf32>
    %90 = arith.addf %87, %89 : vector<1x1x2x128xf32>
    %cst_33 = arith.constant 0.000000e+00 : f32
    %91 = vector.broadcast %cst_33 : f32 to vector<1x1x2x128xf32>
    %92 = arith.cmpf ogt, %5, %91 : vector<1x1x2x128xf32>
    %cst_34 = arith.constant 0.000000e+00 : f32
    %93 = vector.broadcast %0 : f32 to vector<1x1x2x128xf32>
    %94 = vector.broadcast %cst_34 : f32 to vector<1x1x2x128xf32>
    %95 = arith.select %92, %93, %94 : vector<1x1x2x128xi1>, vector<1x1x2x128xf32>
    %96 = math.sqrt %90 : vector<1x1x2x128xf32>
    %97 = vector.broadcast %1 : f32 to vector<1x1x2x128xf32>
    %98 = arith.mulf %97, %96 : vector<1x1x2x128xf32>
    %99 = arith.addf %95, %98 : vector<1x1x2x128xf32>
    %100 = vector.broadcast %2 : f32 to vector<1x1x2x128xf32>
    %101 = arith.addf %99, %100 : vector<1x1x2x128xf32>
    %102 = arith.mulf %5, %101 : vector<1x1x2x128xf32>
    %c0_35 = arith.constant 0 : index
    %c2_36 = arith.constant 2 : index
    %c0_37 = arith.constant 0 : index
    %c0_38 = arith.constant 0 : index
    %103 = vector.load %arg6[%c0_35, %c2_36, %c0_37, %c0_38] : memref<1x4x2x128xf32, #tpu.memory_space<vmem>>, vector<1x1x2x128xf32>
    tpu.vector_store %arg6[%c0_35, %c2_36, %c0_37, %c0_38], %102 {strides = array<i32>} : memref<1x4x2x128xf32, #tpu.memory_space<vmem>>, vector<1x1x2x128xf32>,
    %c12 = arith.constant 12 : index
    %104 = memref.load %arg3[%c12] : memref<16xf32, #tpu.memory_space<smem>>
    %105 = vector.broadcast %104 : f32 to vector<1x1x2x128xf32>
    %106 = arith.mulf %105, %7 : vector<1x1x2x128xf32>
    %c13 = arith.constant 13 : index
    %107 = memref.load %arg3[%c13] : memref<16xf32, #tpu.memory_space<smem>>
    %108 = vector.broadcast %107 : f32 to vector<1x1x2x128xf32>
    %109 = arith.mulf %108, %8 : vector<1x1x2x128xf32>
    %110 = arith.addf %106, %109 : vector<1x1x2x128xf32>
    %c14 = arith.constant 14 : index
    %111 = memref.load %arg3[%c14] : memref<16xf32, #tpu.memory_space<smem>>
    %112 = vector.broadcast %111 : f32 to vector<1x1x2x128xf32>
    %113 = arith.mulf %112, %9 : vector<1x1x2x128xf32>
    %114 = arith.addf %110, %113 : vector<1x1x2x128xf32>
    %c15 = arith.constant 15 : index
    %115 = memref.load %arg3[%c15] : memref<16xf32, #tpu.memory_space<smem>>
    %116 = vector.broadcast %115 : f32 to vector<1x1x2x128xf32>
    %117 = arith.mulf %116, %10 : vector<1x1x2x128xf32>
    %118 = arith.addf %114, %117 : vector<1x1x2x128xf32>
    %c3_39 = arith.constant 3 : index
    %119 = memref.load %arg4[%c3_39] : memref<4xf32, #tpu.memory_space<smem>>
    %120 = vector.broadcast %119 : f32 to vector<1x1x2x128xf32>
    %121 = arith.addf %118, %120 : vector<1x1x2x128xf32>
    %cst_40 = arith.constant 0.000000e+00 : f32
    %122 = vector.broadcast %cst_40 : f32 to vector<1x1x2x128xf32>
    %123 = arith.cmpf ogt, %6, %122 : vector<1x1x2x128xf32>
    %cst_41 = arith.constant 0.000000e+00 : f32
    %124 = vector.broadcast %0 : f32 to vector<1x1x2x128xf32>
    %125 = vector.broadcast %cst_41 : f32 to vector<1x1x2x128xf32>
    %126 = arith.select %123, %124, %125 : vector<1x1x2x128xi1>, vector<1x1x2x128xf32>
    %127 = math.sqrt %121 : vector<1x1x2x128xf32>
    %128 = vector.broadcast %1 : f32 to vector<1x1x2x128xf32>
    %129 = arith.mulf %128, %127 : vector<1x1x2x128xf32>
    %130 = arith.addf %126, %129 : vector<1x1x2x128xf32>
    %131 = vector.broadcast %2 : f32 to vector<1x1x2x128xf32>
    %132 = arith.addf %130, %131 : vector<1x1x2x128xf32>
    %133 = arith.mulf %6, %132 : vector<1x1x2x128xf32>
    %c0_42 = arith.constant 0 : index
    %c3_43 = arith.constant 3 : index
    %c0_44 = arith.constant 0 : index
    %c0_45 = arith.constant 0 : index
    %134 = vector.load %arg6[%c0_42, %c3_43, %c0_44, %c0_45] : memref<1x4x2x128xf32, #tpu.memory_space<vmem>>, vector<1x1x2x128xf32>
    tpu.vector_store %arg6[%c0_42, %c3_43, %c0_44, %c0_45], %133 {strides = array<i32>} : memref<1x4x2x128xf32, #tpu.memory_space<vmem>>, vector<1x1x2x128xf32>,
    return
  }
  func.func @transform_0(%arg0: i32, %arg1: i32) -> i32 {
    %c0_i32 = arith.constant 0 : i32
    %c0_i32_0 = arith.constant 0 : i32
    return %c0_i32 : i32
  }
  func.func @transform_1(%arg0: i32, %arg1: i32) -> i32 {
    %c0_i32 = arith.constant 0 : i32
    %c0_i32_0 = arith.constant 0 : i32
    return %c0_i32 : i32
  }
  func.func @transform_2(%arg0: i32, %arg1: i32) -> i32 {
    %c0_i32 = arith.constant 0 : i32
    %c0_i32_0 = arith.constant 0 : i32
    return %c0_i32 : i32
  }
  func.func @transform_3(%arg0: i32, %arg1: i32) -> (i32, i32, i32, i32) {
    %c0_i32 = arith.constant 0 : i32
    %c0_i32_0 = arith.constant 0 : i32
    %c0_i32_1 = arith.constant 0 : i32
    return %arg0, %c0_i32, %arg1, %c0_i32_0 : i32, i32, i32, i32
  }
  func.func @transform_4(%arg0: i32, %arg1: i32) -> (i32, i32, i32, i32) {
    %c0_i32 = arith.constant 0 : i32
    %c0_i32_0 = arith.constant 0 : i32
    %c0_i32_1 = arith.constant 0 : i32
    return %arg0, %c0_i32, %arg1, %c0_i32_0 : i32, i32, i32, i32
  }
}

</mosaic_0001>

<llo_original>
// kernel: tpu_custom_call.1
$region0: #{tpu_custom_call.1}
  #allocation0 [shape = 'u32[]', space=smem, size = 0x4, offset = 0x4, fixed_abs, tag = 'smem constant byte address 0x4 - core index']
  #allocation1 [shape = 'u32[144,128]{1,0:T(1,128)}', space=vmem, size = 0x12000, scoped, tag = 'internal scratch']
  %s0 = inlined_call_operand.hbm [shape: f32[3], index: 0, kind: input, shape index: {}]
  %s1 = inlined_call_operand.vmem [shape: f32[16], index: 1, kind: input, shape index: {}]
  %s2 = inlined_call_operand.vmem [shape: f32[4], index: 2, kind: input, shape index: {}]
  %s3 = inlined_call_operand.hbm [shape: f32[2,4,2,128], index: 3, kind: input, shape index: {}]
  %s4 = inlined_call_operand.hbm [shape: f32[2,4,2,128], index: 4, kind: output, shape index: {}]
  %s5 = sld [smem:[#allocation0]]
  $region65: #{tpu_custom_call.1} parent=0
    _
  %s7 = ssub.s32 1, %s5
  %s8 = scalar_select 0, %s7, %s5
  $region1: #{tpu_custom_call.1} parent=0
    #allocation2 [shape = 'u8[512]{0}', space=smem, size = 0x200, scoped, tag = 'input window, operand 0, single buffered']
    #allocation3 [shape = 's32[2]{0}', space=sflag, size = 0x8, scoped, tag = 'scoped memory for tpu_custom_call.1']
    #allocation4 [shape = 's32[2]{0}', space=sflag, size = 0x8, scoped, tag = 'scoped memory for tpu_custom_call.1']
    #allocation5 [shape = 's32[2]{0}', space=sflag, size = 0x8, scoped, tag = 'scoped memory for tpu_custom_call.1']
    #allocation6 [shape = 's32[2]{0}', space=sflag, size = 0x8, scoped, tag = 'scoped memory for tpu_custom_call.1']
    #allocation7 [shape = 'u8[512]{0}', space=smem, size = 0x200, scoped, tag = 'input window, operand 1, single buffered']
    #allocation8 [shape = 'u8[512]{0}', space=smem, size = 0x200, scoped, tag = 'input window, operand 2, single buffered']
    #allocation9 [shape = 's32[1]{0}', space=sflag, size = 0x4, scoped, tag = 'scoped memory for tpu_custom_call.1']
    #allocation10 [shape = 'u8[8192]{0}', space=vmem, size = 0x2000, scoped, tag = 'input window, operand 3']
    #allocation11 [shape = 'u8[8192]{0}', space=vmem, size = 0x2000, scoped, tag = 'output window, operand 0']
    %9 = vsyncpa [#allocation5], 0
    %10 = vsyncpa [#allocation6], 0
    %11 = vsyncpa [#allocation9], 0
    %12 = vsyncpa [#allocation3], 0
    %s13 = scalar_lea.sflag [#allocation3], 1
    %14 = vsyncpa %s13, 0
    %15 = vsyncpa [#allocation4], 0
    %s16 = scalar_lea.sflag [#allocation4], 1
    %17 = vsyncpa %s16, 0
    loop: start=0, step=1, limit=4
    $region2: #{tpu_custom_call.1} parent=1 // loop_pre_header
      _
    $region3: #{tpu_custom_call.1} parent=1 // loop_header
      %s19 = sphi 0, %s23
      %p20 = scmp.ge.s32.totalorder %s19, 4
      %s26 = sphi 0, %s38
      %s27 = sphi 0, %s34
      %s28 = sphi 0, %s26
      %s29 = sphi 0, %s27
      %s30 = sphi 0, %s28
      %s31 = sphi 0, %s29
      %s39 = sphi 0, %s39
      %s41 = sphi 0, %s39
      %s42 = sphi 0, %s41
      %s56 = sphi 0, %s42
      %s60 = sphi 0, %s60
      %s62 = sphi 0, %s60
      %s63 = sphi 0, %s62
      %s77 = sphi 0, %s63
      %s81 = sphi 0, %s81
      %s83 = sphi 0, %s81
      %s84 = sphi 0, %s83
      %s98 = sphi 0, %s84
      %s106 = sphi 0, %s108
      %s109 = sphi 0, %s106
      %s110 = sphi 0, %s109
      %s126 = sphi 0, %s110
      %s134 = sphi 0, %s136
      %s137 = sphi 0, %s134
      %s138 = sphi 0, %s137
      %s154 = sphi 0, %s138
    $region4: #{tpu_custom_call.1} parent=1 // loop_header_branch
      %22 = sbr.rel (%p20) target = $region8
    $region5: #{tpu_custom_call.1} parent=1 // loop_body
      %s24 = ssub.s32 %s19, 1
      %s25 = ssub.s32 %s19, 2
      %s32 = sadd.s32 1, %s27
      %p33 = scmp.ge.s32.totalorder %s32, 1
      %s34 = scalar_select %p33, 0, %s32
      %s35 = sadd.s32 1, %s26
      %s36 = scalar_select %p33, %s35, %s26
      %p37 = scmp.ge.s32.totalorder %s36, 2
      %s38 = scalar_select %p37, 0, %s36
      %s40 = sadd.s32 %s39, 1
      %p43 = scmp.eq.s32.totalorder %s19, 1
      %p44 = scmp.ne.s32.totalorder %s39, %s41
      %p45 = scmp.eq.s32.totalorder %s19, 0
      %p46 = por %p44, %p45
      %p47 = scmp.ne.s32.totalorder %s39, %s41
      %p48 = scmp.eq.s32.totalorder %s24, 1
      %p49 = por %p47, %p48
      %p50 = scmp.ne.s32.totalorder %s41, %s42
      %p51 = scmp.eq.s32.totalorder %s24, 0
      %p52 = por %p50, %p51
      %p53 = scmp.ne.s32.totalorder %s41, %s42
      %p54 = scmp.eq.s32.totalorder %s25, 1
      %p55 = por %p53, %p54
      %p57 = scmp.ne.s32.totalorder %s42, %s56
      %p58 = scmp.eq.s32.totalorder %s25, 0
      %p59 = por %p57, %p58
      %s61 = sadd.s32 %s60, 1
      %p64 = scmp.eq.s32.totalorder %s19, 1
      %p65 = scmp.ne.s32.totalorder %s60, %s62
      %p66 = scmp.eq.s32.totalorder %s19, 0
      %p67 = por %p65, %p66
      %p68 = scmp.ne.s32.totalorder %s60, %s62
      %p69 = scmp.eq.s32.totalorder %s24, 1
      %p70 = por %p68, %p69
      %p71 = scmp.ne.s32.totalorder %s62, %s63
      %p72 = scmp.eq.s32.totalorder %s24, 0
      %p73 = por %p71, %p72
      %p74 = scmp.ne.s32.totalorder %s62, %s63
      %p75 = scmp.eq.s32.totalorder %s25, 1
      %p76 = por %p74, %p75
      %p78 = scmp.ne.s32.totalorder %s63, %s77
      %p79 = scmp.eq.s32.totalorder %s25, 0
      %p80 = por %p78, %p79
      %s82 = sadd.s32 %s81, 1
      %p85 = scmp.eq.s32.totalorder %s19, 1
      %p86 = scmp.ne.s32.totalorder %s81, %s83
      %p87 = scmp.eq.s32.totalorder %s19, 0
      %p88 = por %p86, %p87
      %p89 = scmp.ne.s32.totalorder %s81, %s83
      %p90 = scmp.eq.s32.totalorder %s24, 1
      %p91 = por %p89, %p90
      %p92 = scmp.ne.s32.totalorder %s83, %s84
      %p93 = scmp.eq.s32.totalorder %s24, 0
      %p94 = por %p92, %p93
      %p95 = scmp.ne.s32.totalorder %s83, %s84
      %p96 = scmp.eq.s32.totalorder %s25, 1
      %p97 = por %p95, %p96
      %p99 = scmp.ne.s32.totalorder %s84, %s98
      %p100 = scmp.eq.s32.totalorder %s25, 0
      %p101 = por %p99, %p100
      %s102 = ssub.s32 %s26, %s38
      %s103 = ssub.s32 %s27, %s34
      %s104 = sor.u32 %s102, %s103
      %p105 = scmp.eq.s32.totalorder %s104, 0
      %s107 = sadd.s32 %s106, 1
      %s108 = scalar_select %p105, %s106, %s107
      %p111 = pneg %p105
      %p112 = scmp.eq.s32.totalorder %s19, 1
      %p113 = por %p111, %p112
      %p114 = scmp.ne.s32.totalorder %s106, %s109
      %p115 = scmp.eq.s32.totalorder %s19, 0
      %p116 = por %p114, %p115
      %p117 = scmp.ne.s32.totalorder %s106, %s109
      %p118 = scmp.eq.s32.totalorder %s24, 1
      %p119 = por %p117, %p118
      %p120 = scmp.ne.s32.totalorder %s109, %s110
      %p121 = scmp.eq.s32.totalorder %s24, 0
      %p122 = por %p120, %p121
      %p123 = scmp.ne.s32.totalorder %s109, %s110
      %p124 = scmp.eq.s32.totalorder %s25, 1
      %p125 = por %p123, %p124
      %p127 = scmp.ne.s32.totalorder %s110, %s126
      %p128 = scmp.eq.s32.totalorder %s25, 0
      %p129 = por %p127, %p128
      %s130 = ssub.s32 %s26, %s38
      %s131 = ssub.s32 %s27, %s34
      %s132 = sor.u32 %s130, %s131
      %p133 = scmp.eq.s32.totalorder %s132, 0
      %s135 = sadd.s32 %s134, 1
      %s136 = scalar_select %p133, %s134, %s135
      %p139 = pneg %p133
      %p140 = scmp.eq.s32.totalorder %s19, 1
      %p141 = por %p139, %p140
      %p142 = scmp.ne.s32.totalorder %s134, %s137
      %p143 = scmp.eq.s32.totalorder %s19, 0
      %p144 = por %p142, %p143
      %p145 = scmp.ne.s32.totalorder %s134, %s137
      %p146 = scmp.eq.s32.totalorder %s24, 1
      %p147 = por %p145, %p146
      %p148 = scmp.ne.s32.totalorder %s137, %s138
      %p149 = scmp.eq.s32.totalorder %s24, 0
      %p150 = por %p148, %p149
      %p151 = scmp.ne.s32.totalorder %s137, %s138
      %p152 = scmp.eq.s32.totalorder %s25, 1
      %p153 = por %p151, %p152
      %p155 = scmp.ne.s32.totalorder %s138, %s154
      %p156 = scmp.eq.s32.totalorder %s25, 0
      %p157 = por %p155, %p156
      %p158 = scmp.le.s32.totalorder 1, %s19
      %p159 = scmp.lt.s32.totalorder %s19, 3
      %p160 = pnand %p158, %p159
      %p161 = pneg %p160
      // Predicated region
      $region9: #{tpu_custom_call.1} parent=5 // pred_check
        _
      $region10: #{tpu_custom_call.1} parent=5 // pred_check_branch
        %163 = sbr.rel (%p160) target = $region12
      $region11: #{tpu_custom_call.1} parent=5 // pred_region
        %s164 = ssub.s32 %s19, 1
        // Predicated region
        $region13: #{tpu_custom_call.1} parent=11 // pred_check
          %p165 = pneg %p52
        $region14: #{tpu_custom_call.1} parent=11 // pred_check_branch
          %167 = sbr.rel (%p165) target = $region16
        $region15: #{tpu_custom_call.1} parent=11 // pred_region
          %s169 = ssub.s32 16, 16
          %170 = vsyncadd [#allocation5], %s169
          %173 = dma.hbm_to_smem %s0, 16, [#allocation2], [#allocation5]
        $region16: #{tpu_custom_call.1} parent=11 // pred_fallthru
          _
        // Predicated region
        $region17: #{tpu_custom_call.1} parent=11 // pred_check
          %p174 = pneg %p73
        $region18: #{tpu_custom_call.1} parent=11 // pred_check_branch
          %176 = sbr.rel (%p174) target = $region20
        $region19: #{tpu_custom_call.1} parent=11 // pred_region
          %s178 = ssub.s32 16, 16
          %179 = vsyncadd [#allocation6], %s178
          %s181 = sshll.u32 %s1, 4
          %s182 = int_to_ptr.vmem [resolvable:$true] %s181
          %184 = dma.vmem_to_smem %s182, 16, [#allocation7], [#allocation6]
        $region20: #{tpu_custom_call.1} parent=11 // pred_fallthru
          _
        // Predicated region
        $region21: #{tpu_custom_call.1} parent=11 // pred_check
          %p185 = pneg %p94
        $region22: #{tpu_custom_call.1} parent=11 // pred_check_branch
          %187 = sbr.rel (%p185) target = $region24
        $region23: #{tpu_custom_call.1} parent=11 // pred_region
          %s189 = ssub.s32 16, 16
          %190 = vsyncadd [#allocation9], %s189
          %s192 = sshll.u32 %s2, 4
          %s193 = int_to_ptr.vmem [resolvable:$true] %s192
          %195 = dma.vmem_to_smem %s193, 16, [#allocation8], [#allocation9]
        $region24: #{tpu_custom_call.1} parent=11 // pred_fallthru
          _
      $region12: #{tpu_custom_call.1} parent=5 // pred_fallthru
        _
      %p196 = scmp.lt.s32.totalorder %s19, 2
      // Predicated region
      $region25: #{tpu_custom_call.1} parent=5 // pred_check
        %p197 = pneg %p196
      $region26: #{tpu_custom_call.1} parent=5 // pred_check_branch
        %199 = sbr.rel (%p197) target = $region28
      $region27: #{tpu_custom_call.1} parent=5 // pred_region
        // Predicated region
        $region29: #{tpu_custom_call.1} parent=27 // pred_check
          %p200 = pneg %p116
        $region30: #{tpu_custom_call.1} parent=27 // pred_check_branch
          %202 = sbr.rel (%p200) target = $region32
        $region31: #{tpu_custom_call.1} parent=27 // pred_region
          %s203 = sand.u32 %s106, 1
          %s204 = scalar_lea.sflag [#allocation3], %s203
          %s205 = sand.u32 %s106, 1
          %s206 = smul.addr %s205, 8
          %s207 = scalar_lea.vmem [#allocation10], %s206
          %s209 = ssub.s32 128, 128
          %210 = vsyncadd %s204, %s209
          %s211 = smul.addr %s26, 4
          %s212 = sadd.s32 %s27, %s211
          %s213 = smul.addr %s212, 32
          %s214 = scalar_lea.hbm %s3, %s213
          %s215 = sshll.u32 %s207, 4
          %s216 = int_to_ptr.vmem [resolvable:$true] %s215
          %221 = dma.hbm_to_vmem [thread:$0]  %s214, 128, %s216, %s204, 32, 32, 2
        $region32: #{tpu_custom_call.1} parent=27 // pred_fallthru
          _
      $region28: #{tpu_custom_call.1} parent=5 // pred_fallthru
        _
      %p222 = scmp.le.s32.totalorder 1, %s19
      %p223 = scmp.lt.s32.totalorder %s19, 3
      %p224 = pnand %p222, %p223
      %p225 = pneg %p224
      // Predicated region
      $region33: #{tpu_custom_call.1} parent=5 // pred_check
        _
      $region34: #{tpu_custom_call.1} parent=5 // pred_check_branch
        %227 = sbr.rel (%p224) target = $region36
      $region35: #{tpu_custom_call.1} parent=5 // pred_region
        %s228 = ssub.s32 %s19, 1
        // Predicated region
        $region37: #{tpu_custom_call.1} parent=35 // pred_check
          %p229 = pneg %p52
        $region38: #{tpu_custom_call.1} parent=35 // pred_check_branch
          %231 = sbr.rel (%p229) target = $region40
        $region39: #{tpu_custom_call.1} parent=35 // pred_region
          %232 = dma.done [#allocation5], 16
        $region40: #{tpu_custom_call.1} parent=35 // pred_fallthru
          _
        // Predicated region
        $region41: #{tpu_custom_call.1} parent=35 // pred_check
          %p233 = pneg %p73
        $region42: #{tpu_custom_call.1} parent=35 // pred_check_branch
          %235 = sbr.rel (%p233) target = $region44
        $region43: #{tpu_custom_call.1} parent=35 // pred_region
          %236 = dma.done [#allocation6], 16
        $region44: #{tpu_custom_call.1} parent=35 // pred_fallthru
          _
        // Predicated region
        $region45: #{tpu_custom_call.1} parent=35 // pred_check
          %p237 = pneg %p94
        $region46: #{tpu_custom_call.1} parent=35 // pred_check_branch
          %239 = sbr.rel (%p237) target = $region48
        $region47: #{tpu_custom_call.1} parent=35 // pred_region
          %240 = dma.done [#allocation9], 16
        $region48: #{tpu_custom_call.1} parent=35 // pred_fallthru
          _
        %s241 = sand.u32 %s109, 1
        %s242 = scalar_lea.sflag [#allocation3], %s241
        %s243 = sand.u32 %s109, 1
        %s244 = smul.addr %s243, 8
        %s245 = scalar_lea.vmem [#allocation10], %s244
        // Predicated region
        $region49: #{tpu_custom_call.1} parent=35 // pred_check
          %p246 = pneg %p122
        $region50: #{tpu_custom_call.1} parent=35 // pred_check_branch
          %248 = sbr.rel (%p246) target = $region52
        $region51: #{tpu_custom_call.1} parent=35 // pred_region
          %249 = dma.done %s242, 128
        $region52: #{tpu_custom_call.1} parent=35 // pred_fallthru
          _
        %250 = sfence
        %p251 = pneg %p52
        %p252 = pneg %p49
        %p253 = pneg %p73
        %p254 = pneg %p70
        %p255 = pneg %p94
        %p256 = pneg %p91
        %s257 = sand.u32 %s109, 1
        %s258 = scalar_lea.sflag [#allocation3], %s257
        %s259 = sand.u32 %s109, 1
        %s260 = smul.addr %s259, 8
        %s261 = scalar_lea.vmem [#allocation10], %s260
        %p262 = pneg %p122
        %p263 = pneg %p119
        %p264 = pneg %p150
        %p265 = pneg %p147
        %s266 = sand.u32 %s137, 1
        %s267 = scalar_lea.sflag [#allocation4], %s266
        %s268 = sand.u32 %s137, 1
        %s269 = smul.addr %s268, 8
        %s270 = scalar_lea.vmem [#allocation11], %s269
        %s271 = sld [smem:[#allocation2]]
        %s272 = sld [smem:[#allocation2 + $0x1]]
        %s273 = sld [smem:[#allocation2 + $0x2]]
        %v274 = vld [vmem:[%s245] sm:$0x3]
        %s275 = scalar_lea.vmem %s245, 2 [#allocation10]
        %v276 = vld [vmem:[%s275] sm:$0x3]
        %s277 = scalar_lea.vmem %s245, 4 [#allocation10]
        %v278 = vld [vmem:[%s277] sm:$0x3]
        %s279 = scalar_lea.vmem %s245, 6 [#allocation10]
        %v280 = vld [vmem:[%s279] sm:$0x3]
        %v281 = vmul.f32 %v274, %v274
        %v282 = vmul.f32 %v276, %v276
        %v283 = vmul.f32 %v278, %v278
        %v284 = vmul.f32 %v280, %v280
        %s285 = sld [smem:[#allocation7]]
        %v286 = vstv %s285
        %v287 = vmul.f32 %v286, %v281
        %s288 = sld [smem:[#allocation7 + $0x1]]
        %v289 = vstv %s288
        %v290 = vmul.f32 %v289, %v282
        %v291 = vadd.f32 %v287, %v290
        %s292 = sld [smem:[#allocation7 + $0x2]]
        %v293 = vstv %s292
        %v294 = vmul.f32 %v293, %v283
        %v295 = vadd.f32 %v291, %v294
        %s296 = sld [smem:[#allocation7 + $0x3]]
        %v297 = vstv %s296
        %v298 = vmul.f32 %v297, %v284
        %v299 = vadd.f32 %v295, %v298
        %s300 = sld [smem:[#allocation8]]
        %v301 = vstv %s300
        %v302 = vadd.f32 %v299, %v301
        %vm303 = vcmp.gt.f32.partialorder %v274, 0.0
        %v304 = vstv %s271
        %v305 = vsel %vm303, %v304, 0.0
        %v306 = vrsqrt.pop %v302
        %v307 = vmul.f32 %v302, %v306
        %vm308 = vcmp.eq.f32.partialorder %v302, inf
        %v309 = vsel %vm308, %v302, %v307
        %vm310 = vcmp.eq.f32.partialorder %v302, 0.0
        %v311 = vand.u32 %v302, 2147483648
        %v312 = vsel %vm310, %v311, %v309
        %v313 = vstv %s272
        %v314 = vmul.f32 %v313, %v312
        %v315 = vadd.f32 %v305, %v314
        %v316 = vstv %s273
        %v317 = vadd.f32 %v315, %v316
        %v318 = vmul.f32 %v274, %v317
        %319 = vst [vmem:[%s270] sm:$0x3] %v318
        %s320 = sld [smem:[#allocation7 + $0x4]]
        %v321 = vstv %s320
        %v322 = vmul.f32 %v321, %v281
        %s323 = sld [smem:[#allocation7 + $0x5]]
        %v324 = vstv %s323
        %v325 = vmul.f32 %v324, %v282
        %v326 = vadd.f32 %v322, %v325
        %s327 = sld [smem:[#allocation7 + $0x6]]
        %v328 = vstv %s327
        %v329 = vmul.f32 %v328, %v283
        %v330 = vadd.f32 %v326, %v329
        %s331 = sld [smem:[#allocation7 + $0x7]]
        %v332 = vstv %s331
        %v333 = vmul.f32 %v332, %v284
        %v334 = vadd.f32 %v330, %v333
        %s335 = sld [smem:[#allocation8 + $0x1]]
        %v336 = vstv %s335
        %v337 = vadd.f32 %v334, %v336
        %vm338 = vcmp.gt.f32.partialorder %v276, 0.0
        %v339 = vsel %vm338, %v304, 0.0
        %v340 = vrsqrt.pop %v337
        %v341 = vmul.f32 %v337, %v340
        %vm342 = vcmp.eq.f32.partialorder %v337, inf
        %v343 = vsel %vm342, %v337, %v341
        %vm344 = vcmp.eq.f32.partialorder %v337, 0.0
        %v345 = vand.u32 %v337, 2147483648
        %v346 = vsel %vm344, %v345, %v343
        %v347 = vmul.f32 %v313, %v346
        %v348 = vadd.f32 %v339, %v347
        %v349 = vadd.f32 %v348, %v316
        %v350 = vmul.f32 %v276, %v349
        %s351 = scalar_lea.vmem %s270, 2 [#allocation11]
        %352 = vst [vmem:[%s351] sm:$0x3] %v350
        %s353 = sld [smem:[#allocation7 + $0x8]]
        %v354 = vstv %s353
        %v355 = vmul.f32 %v354, %v281
        %s356 = sld [smem:[#allocation7 + $0x9]]
        %v357 = vstv %s356
        %v358 = vmul.f32 %v357, %v282
        %v359 = vadd.f32 %v355, %v358
        %s360 = sld [smem:[#allocation7 + $0xa]]
        %v361 = vstv %s360
        %v362 = vmul.f32 %v361, %v283
        %v363 = vadd.f32 %v359, %v362
        %s364 = sld [smem:[#allocation7 + $0xb]]
        %v365 = vstv %s364
        %v366 = vmul.f32 %v365, %v284
        %v367 = vadd.f32 %v363, %v366
        %s368 = sld [smem:[#allocation8 + $0x2]]
        %v369 = vstv %s368
        %v370 = vadd.f32 %v367, %v369
        %vm371 = vcmp.gt.f32.partialorder %v278, 0.0
        %v372 = vsel %vm371, %v304, 0.0
        %v373 = vrsqrt.pop %v370
        %v374 = vmul.f32 %v370, %v373
        %vm375 = vcmp.eq.f32.partialorder %v370, inf
        %v376 = vsel %vm375, %v370, %v374
        %vm377 = vcmp.eq.f32.partialorder %v370, 0.0
        %v378 = vand.u32 %v370, 2147483648
        %v379 = vsel %vm377, %v378, %v376
        %v380 = vmul.f32 %v313, %v379
        %v381 = vadd.f32 %v372, %v380
        %v382 = vadd.f32 %v381, %v316
        %v383 = vmul.f32 %v278, %v382
        %s384 = scalar_lea.vmem %s270, 4 [#allocation11]
        %385 = vst [vmem:[%s384] sm:$0x3] %v383
        %s386 = sld [smem:[#allocation7 + $0xc]]
        %v387 = vstv %s386
        %v388 = vmul.f32 %v387, %v281
        %s389 = sld [smem:[#allocation7 + $0xd]]
        %v390 = vstv %s389
        %v391 = vmul.f32 %v390, %v282
        %v392 = vadd.f32 %v388, %v391
        %s393 = sld [smem:[#allocation7 + $0xe]]
        %v394 = vstv %s393
        %v395 = vmul.f32 %v394, %v283
        %v396 = vadd.f32 %v392, %v395
        %s397 = sld [smem:[#allocation7 + $0xf]]
        %v398 = vstv %s397
        %v399 = vmul.f32 %v398, %v284
        %v400 = vadd.f32 %v396, %v399
        %s401 = sld [smem:[#allocation8 + $0x3]]
        %v402 = vstv %s401
        %v403 = vadd.f32 %v400, %v402
        %vm404 = vcmp.gt.f32.partialorder %v280, 0.0
        %v405 = vsel %vm404, %v304, 0.0
        %v406 = vrsqrt.pop %v403
        %v407 = vmul.f32 %v403, %v406
        %vm408 = vcmp.eq.f32.partialorder %v403, inf
        %v409 = vsel %vm408, %v403, %v407
        %vm410 = vcmp.eq.f32.partialorder %v403, 0.0
        %v411 = vand.u32 %v403, 2147483648
        %v412 = vsel %vm410, %v411, %v409
        %v413 = vmul.f32 %v313, %v412
        %v414 = vadd.f32 %v405, %v413
        %v415 = vadd.f32 %v414, %v316
        %v416 = vmul.f32 %v280, %v415
        %s417 = scalar_lea.vmem %s270, 6 [#allocation11]
        %418 = vst [vmem:[%s417] sm:$0x3] %v416
        %s419 = sand.u32 %s137, 1
        %s420 = scalar_lea.sflag [#allocation4], %s419
        %s421 = sand.u32 %s137, 1
        %s422 = smul.addr %s421, 8
        %s423 = scalar_lea.vmem [#allocation11], %s422
        // Predicated region
        $region53: #{tpu_custom_call.1} parent=35 // pred_check
          %p424 = pneg %p147
        $region54: #{tpu_custom_call.1} parent=35 // pred_check_branch
          %426 = sbr.rel (%p424) target = $region56
        $region55: #{tpu_custom_call.1} parent=35 // pred_region
          %s428 = ssub.s32 128, 128
          %429 = vsyncadd %s420, %s428
          %s430 = smul.addr %s28, 4
          %s431 = sadd.s32 %s29, %s430
          %s432 = smul.addr %s431, 32
          %s433 = scalar_lea.hbm %s4, %s432
          %s434 = sshll.u32 %s423, 4
          %s435 = int_to_ptr.vmem [resolvable:$true] %s434
          %440 = dma.vmem_to_hbm [thread:$0]  %s435, 128, %s433, %s420, 32, 32, 2
        $region56: #{tpu_custom_call.1} parent=35 // pred_fallthru
          _
      $region36: #{tpu_custom_call.1} parent=5 // pred_fallthru
        _
      %p441 = scmp.le.s32.totalorder 2, %s19
      // Predicated region
      $region57: #{tpu_custom_call.1} parent=5 // pred_check
        %p442 = pneg %p441
      $region58: #{tpu_custom_call.1} parent=5 // pred_check_branch
        %444 = sbr.rel (%p442) target = $region60
      $region59: #{tpu_custom_call.1} parent=5 // pred_region
        %s445 = ssub.s32 %s19, 2
        // Predicated region
        $region61: #{tpu_custom_call.1} parent=59 // pred_check
          %p446 = pneg %p153
        $region62: #{tpu_custom_call.1} parent=59 // pred_check_branch
          %448 = sbr.rel (%p446) target = $region64
        $region63: #{tpu_custom_call.1} parent=59 // pred_region
          %s449 = sand.u32 %s138, 1
          %s450 = scalar_lea.sflag [#allocation4], %s449
          %s451 = sand.u32 %s138, 1
          %s452 = smul.addr %s451, 8
          %s453 = scalar_lea.vmem [#allocation11], %s452
          %454 = dma.done %s450, 128
        $region64: #{tpu_custom_call.1} parent=59 // pred_fallthru
          _
      $region60: #{tpu_custom_call.1} parent=5 // pred_fallthru
        _
    $region6: #{tpu_custom_call.1} parent=1 // loop_footer
      %s23 = sadd.s32 1, %s19
    $region7: #{tpu_custom_call.1} parent=1 // loop_footer_branch
      %18 = sbr.rel target = $region3
    $region8: #{tpu_custom_call.1} parent=1 // loop_exit
      _
    %455 = vsyncpa [#allocation3], 1
    %s456 = scalar_lea.sflag [#allocation3], 1
    %457 = vsyncpa %s456, 1
    %458 = vsyncpa [#allocation4], 1
    %s459 = scalar_lea.sflag [#allocation4], 1
    %460 = vsyncpa %s459, 1
    %461 = vsyncpa [#allocation5], 1
    %s462 = scalar_lea.sflag [#allocation5], 1
    %463 = vsyncpa %s462, 1
    %464 = vsyncpa [#allocation6], 1
    %s465 = scalar_lea.sflag [#allocation6], 1
    %466 = vsyncpa %s465, 1
    %467 = vsyncpa [#allocation9], 1

</llo_original>
